<compile_context>
chip_gen: v6e
topology: v6e:2x2x1
jax: 0.10.0
libtpu: 0.0.40
codegen_flags: <defaults>
</compile_context>

<pallas_src>
import math
import numpy as np
import jax
import jax.numpy as jnp
from jax.experimental import pallas as pl
from jax.experimental.pallas import tpu as pltpu

# ----- '3m' map configuration (from ObsEncoder.__init__) -----
N_ENEMIES = 3
N_AGENTS = 3
MOVE_FEAT_DIM = 4
ENEMY_DIM = 5
ALLY_DIM = 5
OWN_FEATS_DIM = 1
ACTION_NUM = 6 + N_ENEMIES                       # 9
ENEMY_FEATS_DIM = ENEMY_DIM * N_ENEMIES          # 15
ALLY_FEATS_DIM = (N_AGENTS - 1) * ALLY_DIM       # 10
SELF_DIM = MOVE_FEAT_DIM + OWN_FEATS_DIM + ACTION_NUM + N_AGENTS   # 17
OBS_DIM = (MOVE_FEAT_DIM + ENEMY_FEATS_DIM + ALLY_FEATS_DIM
           + OWN_FEATS_DIM + ACTION_NUM + N_AGENTS)                # 42
HIDDEN_DIM = 32
N_BLOCKS = 1 + N_ENEMIES + (N_AGENTS - 1)        # 6 column blocks
WIDE = N_BLOCKS * HIDDEN_DIM                     # 192 fused lanes

# Batch tile: 2048 rows (up from 1024).  Even with zero VMEM buffer reuse the
# working set (~8 wide f32 temporaries of (2048,192->256 lanes) = 16 MiB, plus
# double-buffered IO + weights ~5 MiB) fits under the explicit 32 MiB limit on
# v5e / v6e / v7x, so Mosaic cannot fail allocation at any batch size.
MAX_BATCH_TILE = 2048
VMEM_LIMIT_BYTES = 32 * 1024 * 1024


def _round_up(n, m):
    return ((n + m - 1) // m) * m


# ---------------- host-built constant selector matrices ----------------
_BLK = np.arange(WIDE) // HIDDEN_DIM                         # block id 0..5 per lane
_GRP = np.where(_BLK == 0, -1, np.where(_BLK <= N_ENEMIES, 0, 1))  # -1 self / 0 enemy / 1 ally
_SAME_BLK = (_BLK[:, None] == _BLK[None, :]) & (_BLK[:, None] >= 1)
_SAME_GRP = (_GRP[:, None] == _GRP[None, :]) & (_GRP[:, None] >= 0)
_NGRP = np.where(_GRP == 0, float(N_ENEMIES),
                 np.where(_GRP == 1, float(N_AGENTS - 1), 1.0))
# shifted = prod @ (G - M): per-block score minus per-group mean (softmax shift).
GM_CONST = (_SAME_BLK.astype(np.float64)
            - _SAME_GRP.astype(np.float64) / _NGRP[None, :]).astype(np.float32)
# denom = exp @ D: per-group sum of per-block exp (each block replicated H times,
# hence the 1/H).  Self-block columns get denom == 1 so no inf/NaN appears there.
_SELF_BLK = (_BLK[:, None] == 0) & (_BLK[None, :] == 0)
D_CONST = ((_SAME_GRP | _SELF_BLK).astype(np.float64) / float(HIDDEN_DIM)
           ).astype(np.float32)


# --------------------------- kernel ---------------------------
def obs_encoder_kernel(x_ref, w_big_ref, b_big_ref, bt_ref, gm_ref, d_ref,
                       fw1_ref, w1s_ref, b1_ref, w2_ref, b2_ref, out_ref):
    x = x_ref[...]                                            # (TB, OBS_DIM) f32

    # One fused projection [self | enemy0..2 | ally0..1] + one tanh.
    proj = jnp.tanh(
        jnp.dot(x, w_big_ref[...], preferred_element_type=jnp.float32)
        + b_big_ref[...])                                     # (TB, 192)

    # Attention, entirely in the 192-lane layout (MXU + VPU + EUP only).
    beta_tiled = jnp.dot(proj, bt_ref[...],
                         preferred_element_type=jnp.float32)  # beta replicated/block
    prod = beta_tiled * proj
    shifted = jnp.dot(prod, gm_ref[...],
                      preferred_element_type=jnp.float32)     # score - group mean
    e = jnp.exp(shifted)
    denom = jnp.dot(e, d_ref[...],
                    preferred_element_type=jnp.float32)       # group sum of exps
    alpha = e * pl.reciprocal(denom)                          # exact: keeps 1e-5 match
    weighted = proj * alpha                                   # alpha_i * emb_i per lane

    # encoder_linear: self / enemy-att / ally-att contributions folded into two
    # (192, H) matmuls -- no slicing or concatenation of the attention outputs.
    h1 = jnp.tanh(
        jnp.dot(weighted, fw1_ref[...], preferred_element_type=jnp.float32)
        + jnp.dot(proj, w1s_ref[...], preferred_element_type=jnp.float32)
        + b1_ref[...])
    h2 = jnp.tanh(
        jnp.dot(h1, w2_ref[...], preferred_element_type=jnp.float32)
        + b2_ref[...])

    # TODO(synk): re-check the bundle after the XLU fixes; only revisit a
    # lane-dense (TB/4, 128) output slab if the 32-lane masked store becomes
    # the binding slot (relayout risk not worth it yet).
    out_ref[...] = h2.astype(out_ref.dtype)


# ----------------- host-side weight fusion (call once) -----------------
def prepare_obs_encoder_params(params):
    H = HIDDEN_DIM
    t1 = MOVE_FEAT_DIM + ENEMY_FEATS_DIM + ALLY_FEATS_DIM     # 29

    # Zero-padded block weight: columns [self | enemy0..2 | ally0..1].
    w_big = jnp.zeros((OBS_DIM, WIDE), jnp.float32)
    w_self = params["w_self"].astype(jnp.float32)
    w_big = w_big.at[0:MOVE_FEAT_DIM, 0:H].set(w_self[0:MOVE_FEAT_DIM])
    w_big = w_big.at[t1:t1 + OWN_FEATS_DIM, 0:H].set(
        w_self[MOVE_FEAT_DIM:MOVE_FEAT_DIM + OWN_FEATS_DIM])
    w_big = w_big.at[t1 + OWN_FEATS_DIM:OBS_DIM, 0:H].set(
        w_self[MOVE_FEAT_DIM + OWN_FEATS_DIM:])
    for i in range(N_ENEMIES):
        r0 = MOVE_FEAT_DIM + ENEMY_DIM * i
        c0 = H * (1 + i)
        w_big = w_big.at[r0:r0 + ENEMY_DIM, c0:c0 + H].set(
            params["w_enemy"].astype(jnp.float32))
    for i in range(N_AGENTS - 1):
        r0 = MOVE_FEAT_DIM + ENEMY_FEATS_DIM + ALLY_DIM * i
        c0 = H * (1 + N_ENEMIES + i)
        w_big = w_big.at[r0:r0 + ALLY_DIM, c0:c0 + H].set(
            params["w_ally"].astype(jnp.float32))

    b_big = jnp.concatenate(
        [params["b_self"]] + [params["b_enemy"]] * N_ENEMIES
        + [params["b_ally"]] * (N_AGENTS - 1), axis=1).astype(jnp.float32)

    # BT: beta broadcast matrix (enemy_mat / ally_mat fused, pre-scaled 1/sqrt(H),
    # replicated into each entity block's columns; only the self rows are nonzero).
    inv_sqrt_h = 1.0 / math.sqrt(H)
    e_mat_s = params["enemy_mat"].astype(jnp.float32) * inv_sqrt_h
    a_mat_s = params["ally_mat"].astype(jnp.float32) * inv_sqrt_h
    bt = jnp.zeros((WIDE, WIDE), jnp.float32)
    for i in range(N_ENEMIES):
        bt = bt.at[0:H, H * (1 + i):H * (2 + i)].set(e_mat_s)
    for i in range(N_AGENTS - 1):
        bt = bt.at[0:H, H * (1 + N_ENEMIES + i):H * (2 + N_ENEMIES + i)].set(a_mat_s)

    # encoder_linear first layer, split/folded: W1S applies w1(self rows) to proj,
    # FW1 applies w1(enemy rows) / w1(ally rows) directly to alpha-weighted proj.
    w1 = params["w1"].astype(jnp.float32)
    w1s, w1e, w1a = w1[0:H], w1[H:2 * H], w1[2 * H:3 * H]
    w1s_pad = jnp.concatenate(
        [w1s, jnp.zeros((WIDE - H, H), jnp.float32)], axis=0)          # (192, 32)
    fw1 = jnp.concatenate(
        [jnp.zeros((H, H), jnp.float32)]
        + [w1e] * N_ENEMIES + [w1a] * (N_AGENTS - 1), axis=0)          # (192, 32)

    gm = jnp.asarray(GM_CONST)
    d = jnp.asarray(D_CONST)
    return (w_big, b_big, bt, gm, d, fw1, w1s_pad,
            params["b1"].astype(jnp.float32),
            params["w2"].astype(jnp.float32),
            params["b2"].astype(jnp.float32))


# --------------------------- wrapper ---------------------------
def _choose_batch_tile(B):
    if B < 16:
        return B                                  # single full-array block
    # >= 2 grid steps so both v7x TensorCores get work; tile is a multiple of 8.
    tb = _round_up(-(-B // 2), 8)
    return min(tb, MAX_BATCH_TILE)


@jax.jit
def obs_encoder_fused(inputs, fused):
    B = inputs.shape[0]
    x = inputs.astype(jnp.float32)
    tb = _choose_batch_tile(B)
    grid = (pl.cdiv(B, tb),)                      # ragged tail block is masked

    const_map = lambda i: (0, 0)                  # weights stay resident in VMEM
    w_specs = [pl.BlockSpec(w.shape, const_map) for w in fused]

    return pl.pallas_call(
        obs_encoder_kernel,
        out_shape=jax.ShapeDtypeStruct((B, HIDDEN_DIM), jnp.float32),
        grid=grid,
        in_specs=[pl.BlockSpec((tb, OBS_DIM), lambda i: (i, 0))] + w_specs,
        out_specs=pl.BlockSpec((tb, HIDDEN_DIM), lambda i: (i, 0)),
        compiler_params=pltpu.CompilerParams(
            dimension_semantics=("parallel",),
            vmem_limit_bytes=VMEM_LIMIT_BYTES),
    )(x, *fused)


@jax.jit
def obs_encoder(inputs, params):
    # Convenience path; for repeated calls prefer prepare_obs_encoder_params()
    # once + obs_encoder_fused().
    return obs_encoder_fused(inputs, prepare_obs_encoder_params(params))


# ----- deterministic parameter init (shapes from the module's __init__) -----
def init_params(key, hidden_dim=HIDDEN_DIM):
    ks = jax.random.split(key, 12)

    def linear(kw, kb, fan_in, fan_out):
        bound = 1.0 / math.sqrt(fan_in)
        w = jax.random.uniform(kw, (fan_in, fan_out), jnp.float32, -bound, bound)
        b = jax.random.uniform(kb, (1, fan_out), jnp.float32, -bound, bound)
        return w, b

    w_self, b_self = linear(ks[0], ks[1], SELF_DIM, hidden_dim)
    w_enemy, b_enemy = linear(ks[2], ks[3], ENEMY_DIM, hidden_dim)
    w_ally, b_ally = linear(ks[4], ks[5], ALLY_DIM, hidden_dim)
    w1, b1 = linear(ks[6], ks[7], hidden_dim * 3, hidden_dim)
    w2, b2 = linear(ks[8], ks[9], hidden_dim, hidden_dim)
    ortho = jax.nn.initializers.orthogonal(scale=1.0)
    enemy_mat = ortho(ks[10], (hidden_dim, hidden_dim), jnp.float32)
    ally_mat = ortho(ks[11], (hidden_dim, hidden_dim), jnp.float32)
    return dict(w_self=w_self, b_self=b_self, w_enemy=w_enemy, b_enemy=b_enemy,
                w_ally=w_ally, b_ally=b_ally, enemy_mat=enemy_mat,
                ally_mat=ally_mat, w1=w1, b1=b1, w2=w2, b2=b2)


# ----- pure-JAX reference mirroring the PyTorch forward exactly -----
def obs_encoder_ref(inputs, p):
    t1 = MOVE_FEAT_DIM + ENEMY_FEATS_DIM + ALLY_FEATS_DIM
    t2 = ACTION_NUM + N_AGENTS
    self_in = jnp.concatenate([inputs[:, :MOVE_FEAT_DIM],
                               inputs[:, t1:t1 + OWN_FEATS_DIM],
                               inputs[:, -t2:]], axis=1)
    self_emb = jnp.tanh(self_in @ p["w_self"] + p["b_self"])

    def att(mat, w, b, n, base, d):
        beta = self_emb @ mat
        embs = jnp.stack([jnp.tanh(inputs[:, base + d * i: base + d * (i + 1)] @ w + b)
                          for i in range(n)], axis=2)                  # (B, H, n)
        sc = jnp.einsum("bh,bhn->bn", beta, embs) / math.sqrt(HIDDEN_DIM)
        alpha = jax.nn.softmax(sc, axis=1)
        return jnp.einsum("bhn,bn->bh", embs, alpha)

    e_att = att(p["enemy_mat"], p["w_enemy"], p["b_enemy"],
                N_ENEMIES, MOVE_FEAT_DIM, ENEMY_DIM)
    a_att = att(p["ally_mat"], p["w_ally"], p["b_ally"],
                N_AGENTS - 1, MOVE_FEAT_DIM + ENEMY_FEATS_DIM, ALLY_DIM)
    cat = jnp.concatenate([self_emb, e_att, a_att], axis=1)
    h1 = jnp.tanh(cat @ p["w1"] + p["b1"])
    return jnp.tanh(h1 @ p["w2"] + p["b2"])


if __name__ == "__main__":
    key = jax.random.PRNGKey(0)
    k_in, k_par = jax.random.split(key)
    batch = 8
    inputs = jax.random.normal(k_in, (batch, OBS_DIM), jnp.float32)
    params = init_params(k_par)

    fused = prepare_obs_encoder_params(params)         # one-time host-side prep
    out = jax.block_until_ready(obs_encoder_fused(inputs, fused))
    out2 = jax.block_until_ready(obs_encoder(inputs, params))
    ref = jax.block_until_ready(obs_encoder_ref(inputs, params))

    assert out.shape == (batch, HIDDEN_DIM)
    assert jnp.allclose(out, ref, atol=1e-5, rtol=1e-5), \
        f"max abs err {jnp.max(jnp.abs(out - ref))}"
    assert jnp.allclose(out2, ref, atol=1e-5, rtol=1e-5), \
        f"max abs err {jnp.max(jnp.abs(out2 - ref))}"
    print("KERNEL_OK")
</pallas_src>

<mosaic_0001>
module attributes {stable_mosaic.version = 11 : i64} {
  func.func @obs_encoder_kernel(%arg0: i32, %arg1: memref<8x42xf32, #tpu.memory_space<vmem>>, %arg2: memref<42x192xf32, #tpu.memory_space<vmem>>, %arg3: memref<1x192xf32, #tpu.memory_space<vmem>>, %arg4: memref<192x192xf32, #tpu.memory_space<vmem>>, %arg5: memref<192x192xf32, #tpu.memory_space<vmem>>, %arg6: memref<192x192xf32, #tpu.memory_space<vmem>>, %arg7: memref<192x32xf32, #tpu.memory_space<vmem>>, %arg8: memref<192x32xf32, #tpu.memory_space<vmem>>, %arg9: memref<1x32xf32, #tpu.memory_space<vmem>>, %arg10: memref<32x32xf32, #tpu.memory_space<vmem>>, %arg11: memref<1x32xf32, #tpu.memory_space<vmem>>, %arg12: memref<8x32xf32, #tpu.memory_space<vmem>>) attributes {dimension_semantics = [#tpu.dimension_semantics<parallel>], iteration_bounds = array<i64: 1>, scalar_prefetch = 0 : i64, scratch_operands = 0 : i64, tpu.core_type = #tpu.core_type<tc>, window_params = [{transform_indices = @transform_0, window_bounds = array<i64: 8, 42>}, {pipeline_mode = #tpu.pipeline_mode<synchronous>, transform_indices = @transform_1, window_bounds = array<i64: 42, 192>}, {pipeline_mode = #tpu.pipeline_mode<synchronous>, transform_indices = @transform_2, window_bounds = array<i64: 1, 192>}, {pipeline_mode = #tpu.pipeline_mode<synchronous>, transform_indices = @transform_3, window_bounds = array<i64: 192, 192>}, {pipeline_mode = #tpu.pipeline_mode<synchronous>, transform_indices = @transform_4, window_bounds = array<i64: 192, 192>}, {pipeline_mode = #tpu.pipeline_mode<synchronous>, transform_indices = @transform_5, window_bounds = array<i64: 192, 192>}, {pipeline_mode = #tpu.pipeline_mode<synchronous>, transform_indices = @transform_6, window_bounds = array<i64: 192, 32>}, {pipeline_mode = #tpu.pipeline_mode<synchronous>, transform_indices = @transform_7, window_bounds = array<i64: 192, 32>}, {pipeline_mode = #tpu.pipeline_mode<synchronous>, transform_indices = @transform_8, window_bounds = array<i64: 1, 32>}, {pipeline_mode = #tpu.pipeline_mode<synchronous>, transform_indices = @transform_9, window_bounds = array<i64: 32, 32>}, {pipeline_mode = #tpu.pipeline_mode<synchronous>, transform_indices = @transform_10, window_bounds = array<i64: 1, 32>}, {transform_indices = @transform_11, window_bounds = array<i64: 8, 32>}]} {
    %c0 = arith.constant 0 : index
    %c0_0 = arith.constant 0 : index
    %0 = vector.load %arg1[%c0, %c0_0] : memref<8x42xf32, #tpu.memory_space<vmem>>, vector<8x42xf32>
    %c0_1 = arith.constant 0 : index
    %c0_2 = arith.constant 0 : index
    %1 = vector.load %arg2[%c0_1, %c0_2] : memref<42x192xf32, #tpu.memory_space<vmem>>, vector<42x192xf32>
    %cst = arith.constant dense<0.000000e+00> : vector<8x192xf32>
    %2 = tpu.matmul %0, %1, %cst {dimension_numbers = #tpu.dot_dimension_numbers<[1], [0], [0], [1], [0, 0, 1, 1], [], []>} : vector<8x42xf32>, vector<42x192xf32>, vector<8x192xf32> -> vector<8x192xf32>
    %c0_3 = arith.constant 0 : index
    %c0_4 = arith.constant 0 : index
    %3 = vector.load %arg3[%c0_3, %c0_4] : memref<1x192xf32, #tpu.memory_space<vmem>>, vector<1x192xf32>
    %4 = vector.broadcast %3 : vector<1x192xf32> to vector<8x192xf32>
    %5 = arith.addf %2, %4 : vector<8x192xf32>
    %6 = math.tanh %5 : vector<8x192xf32>
    %c0_5 = arith.constant 0 : index
    %c0_6 = arith.constant 0 : index
    %7 = vector.load %arg4[%c0_5, %c0_6] : memref<192x192xf32, #tpu.memory_space<vmem>>, vector<192x192xf32>
    %cst_7 = arith.constant dense<0.000000e+00> : vector<8x192xf32>
    %8 = tpu.matmul %6, %7, %cst_7 {dimension_numbers = #tpu.dot_dimension_numbers<[1], [0], [0], [1], [0, 0, 1, 1], [], []>} : vector<8x192xf32>, vector<192x192xf32>, vector<8x192xf32> -> vector<8x192xf32>
    %9 = arith.mulf %8, %6 : vector<8x192xf32>
    %c0_8 = arith.constant 0 : index
    %c0_9 = arith.constant 0 : index
    %10 = vector.load %arg5[%c0_8, %c0_9] : memref<192x192xf32, #tpu.memory_space<vmem>>, vector<192x192xf32>
    %cst_10 = arith.constant dense<0.000000e+00> : vector<8x192xf32>
    %11 = tpu.matmul %9, %10, %cst_10 {dimension_numbers = #tpu.dot_dimension_numbers<[1], [0], [0], [1], [0, 0, 1, 1], [], []>} : vector<8x192xf32>, vector<192x192xf32>, vector<8x192xf32> -> vector<8x192xf32>
    %12 = math.exp %11 : vector<8x192xf32>
    %c0_11 = arith.constant 0 : index
    %c0_12 = arith.constant 0 : index
    %13 = vector.load %arg6[%c0_11, %c0_12] : memref<192x192xf32, #tpu.memory_space<vmem>>, vector<192x192xf32>
    %cst_13 = arith.constant dense<0.000000e+00> : vector<8x192xf32>
    %14 = tpu.matmul %12, %13, %cst_13 {dimension_numbers = #tpu.dot_dimension_numbers<[1], [0], [0], [1], [0, 0, 1, 1], [], []>} : vector<8x192xf32>, vector<192x192xf32>, vector<8x192xf32> -> vector<8x192xf32>
    %15 = tpu.reciprocal %14 : vector<8x192xf32> -> vector<8x192xf32>
    %16 = arith.mulf %12, %15 : vector<8x192xf32>
    %17 = arith.mulf %6, %16 : vector<8x192xf32>
    %c0_14 = arith.constant 0 : index
    %c0_15 = arith.constant 0 : index
    %18 = vector.load %arg7[%c0_14, %c0_15] : memref<192x32xf32, #tpu.memory_space<vmem>>, vector<192x32xf32>
    %cst_16 = arith.constant dense<0.000000e+00> : vector<8x32xf32>
    %19 = tpu.matmul %17, %18, %cst_16 {dimension_numbers = #tpu.dot_dimension_numbers<[1], [0], [0], [1], [0, 0, 1, 1], [], []>} : vector<8x192xf32>, vector<192x32xf32>, vector<8x32xf32> -> vector<8x32xf32>
    %c0_17 = arith.constant 0 : index
    %c0_18 = arith.constant 0 : index
    %20 = vector.load %arg8[%c0_17, %c0_18] : memref<192x32xf32, #tpu.memory_space<vmem>>, vector<192x32xf32>
    %cst_19 = arith.constant dense<0.000000e+00> : vector<8x32xf32>
    %21 = tpu.matmul %6, %20, %cst_19 {dimension_numbers = #tpu.dot_dimension_numbers<[1], [0], [0], [1], [0, 0, 1, 1], [], []>} : vector<8x192xf32>, vector<192x32xf32>, vector<8x32xf32> -> vector<8x32xf32>
    %22 = arith.addf %19, %21 : vector<8x32xf32>
    %c0_20 = arith.constant 0 : index
    %c0_21 = arith.constant 0 : index
    %23 = vector.load %arg9[%c0_20, %c0_21] : memref<1x32xf32, #tpu.memory_space<vmem>>, vector<1x32xf32>
    %24 = vector.broadcast %23 : vector<1x32xf32> to vector<8x32xf32>
    %25 = arith.addf %22, %24 : vector<8x32xf32>
    %26 = math.tanh %25 : vector<8x32xf32>
    %c0_22 = arith.constant 0 : index
    %c0_23 = arith.constant 0 : index
    %27 = vector.load %arg10[%c0_22, %c0_23] : memref<32x32xf32, #tpu.memory_space<vmem>>, vector<32x32xf32>
    %cst_24 = arith.constant dense<0.000000e+00> : vector<8x32xf32>
    %28 = tpu.matmul %26, %27, %cst_24 {dimension_numbers = #tpu.dot_dimension_numbers<[1], [0], [0], [1], [0, 0, 1, 1], [], []>} : vector<8x32xf32>, vector<32x32xf32>, vector<8x32xf32> -> vector<8x32xf32>
    %c0_25 = arith.constant 0 : index
    %c0_26 = arith.constant 0 : index
    %29 = vector.load %arg11[%c0_25, %c0_26] : memref<1x32xf32, #tpu.memory_space<vmem>>, vector<1x32xf32>
    %30 = vector.broadcast %29 : vector<1x32xf32> to vector<8x32xf32>
    %31 = arith.addf %28, %30 : vector<8x32xf32>
    %32 = math.tanh %31 : vector<8x32xf32>
    %c0_27 = arith.constant 0 : index
    %c0_28 = arith.constant 0 : index
    %33 = vector.load %arg12[%c0_27, %c0_28] : memref<8x32xf32, #tpu.memory_space<vmem>>, vector<8x32xf32>
    tpu.vector_store %arg12[%c0_27, %c0_28], %32 {strides = array<i32>} : memref<8x32xf32, #tpu.memory_space<vmem>>, vector<8x32xf32>,
    return
  }
  func.func @transform_0(%arg0: i32) -> (i32, i32) {
    %c0_i32 = arith.constant 0 : i32
    %c0_i32_0 = arith.constant 0 : i32
    return %arg0, %c0_i32 : i32, i32
  }
  func.func @transform_1(%arg0: i32) -> (i32, i32) {
    %c0_i32 = arith.constant 0 : i32
    %c0_i32_0 = arith.constant 0 : i32
    %c0_i32_1 = arith.constant 0 : i32
    return %c0_i32, %c0_i32_0 : i32, i32
  }
  func.func @transform_2(%arg0: i32) -> (i32, i32) {
    %c0_i32 = arith.constant 0 : i32
    %c0_i32_0 = arith.constant 0 : i32
    %c0_i32_1 = arith.constant 0 : i32
    return %c0_i32, %c0_i32_0 : i32, i32
  }
  func.func @transform_3(%arg0: i32) -> (i32, i32) {
    %c0_i32 = arith.constant 0 : i32
    %c0_i32_0 = arith.constant 0 : i32
    %c0_i32_1 = arith.constant 0 : i32
    return %c0_i32, %c0_i32_0 : i32, i32
  }
  func.func @transform_4(%arg0: i32) -> (i32, i32) {
    %c0_i32 = arith.constant 0 : i32
    %c0_i32_0 = arith.constant 0 : i32
    %c0_i32_1 = arith.constant 0 : i32
    return %c0_i32, %c0_i32_0 : i32, i32
  }
  func.func @transform_5(%arg0: i32) -> (i32, i32) {
    %c0_i32 = arith.constant 0 : i32
    %c0_i32_0 = arith.constant 0 : i32
    %c0_i32_1 = arith.constant 0 : i32
    return %c0_i32, %c0_i32_0 : i32, i32
  }
  func.func @transform_6(%arg0: i32) -> (i32, i32) {
    %c0_i32 = arith.constant 0 : i32
    %c0_i32_0 = arith.constant 0 : i32
    %c0_i32_1 = arith.constant 0 : i32
    return %c0_i32, %c0_i32_0 : i32, i32
  }
  func.func @transform_7(%arg0: i32) -> (i32, i32) {
    %c0_i32 = arith.constant 0 : i32
    %c0_i32_0 = arith.constant 0 : i32
    %c0_i32_1 = arith.constant 0 : i32
    return %c0_i32, %c0_i32_0 : i32, i32
  }
  func.func @transform_8(%arg0: i32) -> (i32, i32) {
    %c0_i32 = arith.constant 0 : i32
    %c0_i32_0 = arith.constant 0 : i32
    %c0_i32_1 = arith.constant 0 : i32
    return %c0_i32, %c0_i32_0 : i32, i32
  }
  func.func @transform_9(%arg0: i32) -> (i32, i32) {
    %c0_i32 = arith.constant 0 : i32
    %c0_i32_0 = arith.constant 0 : i32
    %c0_i32_1 = arith.constant 0 : i32
    return %c0_i32, %c0_i32_0 : i32, i32
  }
  func.func @transform_10(%arg0: i32) -> (i32, i32) {
    %c0_i32 = arith.constant 0 : i32
    %c0_i32_0 = arith.constant 0 : i32
    %c0_i32_1 = arith.constant 0 : i32
    return %c0_i32, %c0_i32_0 : i32, i32
  }
  func.func @transform_11(%arg0: i32) -> (i32, i32) {
    %c0_i32 = arith.constant 0 : i32
    %c0_i32_0 = arith.constant 0 : i32
    return %arg0, %c0_i32 : i32, i32
  }
}

</mosaic_0001>

<llo_original>
// kernel: obs_encoder_fused.1
$region0: #{obs_encoder_fused.1}
  #allocation0 [shape = 'u32[]', space=smem, size = 0x4, offset = 0x4, fixed_abs, tag = 'smem constant byte address 0x4 - core index']
  #allocation1 [shape = 'u32[144,128]{1,0:T(1,128)}', space=vmem, size = 0x12000, scoped, tag = 'internal scratch']
  %s0 = inlined_call_operand.hbm [shape: f32[8,42], index: 0, kind: input, shape index: {}]
  %s1 = inlined_call_operand.vmem [shape: f32[42,192], index: 1, kind: input, shape index: {}]
  %s2 = inlined_call_operand.vmem [shape: f32[1,192], index: 2, kind: input, shape index: {}]
  %s3 = inlined_call_operand.vmem [shape: f32[192,192], index: 3, kind: input, shape index: {}]
  %s4 = inlined_call_operand.hbm [shape: f32[192,192], index: 4, kind: input, shape index: {}]
  %s5 = inlined_call_operand.hbm [shape: f32[192,192], index: 5, kind: input, shape index: {}]
  %s6 = inlined_call_operand.vmem [shape: f32[192,32], index: 6, kind: input, shape index: {}]
  %s7 = inlined_call_operand.vmem [shape: f32[192,32], index: 7, kind: input, shape index: {}]
  %s8 = inlined_call_operand.vmem [shape: f32[1,32], index: 8, kind: input, shape index: {}]
  %s9 = inlined_call_operand.vmem [shape: f32[32,32], index: 9, kind: input, shape index: {}]
  %s10 = inlined_call_operand.vmem [shape: f32[1,32], index: 10, kind: input, shape index: {}]
  %s11 = inlined_call_operand.hbm [shape: f32[8,32], index: 11, kind: output, shape index: {}]
  %s12 = sld [smem:[#allocation0]]
  $region66: #{obs_encoder_fused.1} parent=0
    _
  %s14 = ssub.s32 1, %s12
  %s15 = scalar_select 0, %s14, %s12
  $region1: #{obs_encoder_fused.1} parent=0
    #allocation2 [shape = 'u8[4096]{0}', space=vmem, size = 0x1000, scoped, tag = 'input window, operand 0, single buffered']
    #allocation3 [shape = 's32[1]{0}', space=sflag, size = 0x4, scoped, tag = 'scoped memory for obs_encoder_fused.1']
    #allocation4 [shape = 's32[1]{0}', space=sflag, size = 0x4, scoped, tag = 'scoped memory for obs_encoder_fused.1']
    #allocation5 [shape = 'u8[196608]{0}', space=vmem, size = 0x30000, scoped, tag = 'input window, operand 4, single buffered']
    #allocation6 [shape = 's32[1]{0}', space=sflag, size = 0x4, scoped, tag = 'scoped memory for obs_encoder_fused.1']
    #allocation7 [shape = 'u8[196608]{0}', space=vmem, size = 0x30000, scoped, tag = 'input window, operand 5, single buffered']
    #allocation8 [shape = 'u8[4096]{0}', space=vmem, size = 0x1000, scoped, tag = 'output window, operand 0, single buffered']
    %16 = vsyncpa [#allocation3], 0
    %17 = vsyncpa [#allocation6], 0
    %18 = vsyncpa [#allocation4], 0
    // Predicated region
    $region2: #{obs_encoder_fused.1} parent=1 // pred_check
      _
    $region3: #{obs_encoder_fused.1} parent=1 // pred_check_branch
      %20 = sbr.rel (0) target = $region5
    $region4: #{obs_encoder_fused.1} parent=1 // pred_region
      %s22 = ssub.s32 128, 128
      %23 = vsyncadd [#allocation3], %s22
      %s25 = sshll.u32 [#allocation2], 4
      %s26 = int_to_ptr.vmem [resolvable:$true] %s25
      %28 = dma.hbm_to_vmem [thread:$0]  %s0, 128, %s26, [#allocation3]
    $region5: #{obs_encoder_fused.1} parent=1 // pred_fallthru
      _
    // Predicated region
    $region6: #{obs_encoder_fused.1} parent=1 // pred_check
      _
    $region7: #{obs_encoder_fused.1} parent=1 // pred_check_branch
      %30 = sbr.rel (0) target = $region9
    $region8: #{obs_encoder_fused.1} parent=1 // pred_region
      _
    $region9: #{obs_encoder_fused.1} parent=1 // pred_fallthru
      _
    // Predicated region
    $region10: #{obs_encoder_fused.1} parent=1 // pred_check
      _
    $region11: #{obs_encoder_fused.1} parent=1 // pred_check_branch
      %32 = sbr.rel (0) target = $region13
    $region12: #{obs_encoder_fused.1} parent=1 // pred_region
      _
    $region13: #{obs_encoder_fused.1} parent=1 // pred_fallthru
      _
    // Predicated region
    $region14: #{obs_encoder_fused.1} parent=1 // pred_check
      _
    $region15: #{obs_encoder_fused.1} parent=1 // pred_check_branch
      %34 = sbr.rel (0) target = $region17
    $region16: #{obs_encoder_fused.1} parent=1 // pred_region
      _
    $region17: #{obs_encoder_fused.1} parent=1 // pred_fallthru
      _
    // Predicated region
    $region18: #{obs_encoder_fused.1} parent=1 // pred_check
      _
    $region19: #{obs_encoder_fused.1} parent=1 // pred_check_branch
      %36 = sbr.rel (0) target = $region21
    $region20: #{obs_encoder_fused.1} parent=1 // pred_region
      %s38 = ssub.s32 6144, 6144
      %39 = vsyncadd [#allocation6], %s38
      %s40 = sshll.u32 [#allocation5], 4
      %s41 = int_to_ptr.vmem [resolvable:$true] %s40
      %46 = dma.hbm_to_vmem [thread:$0]  %s4, 6144, %s41, [#allocation6], 256, 256, 16
    $region21: #{obs_encoder_fused.1} parent=1 // pred_fallthru
      _
    // Predicated region
    $region22: #{obs_encoder_fused.1} parent=1 // pred_check
      _
    $region23: #{obs_encoder_fused.1} parent=1 // pred_check_branch
      %48 = sbr.rel (0) target = $region25
    $region24: #{obs_encoder_fused.1} parent=1 // pred_region
      %s50 = ssub.s32 6144, 6144
      %51 = vsyncadd [#allocation6], %s50
      %s52 = sshll.u32 [#allocation7], 4
      %s53 = int_to_ptr.vmem [resolvable:$true] %s52
      %58 = dma.hbm_to_vmem [thread:$0]  %s5, 6144, %s53, [#allocation6], 256, 256, 16
    $region25: #{obs_encoder_fused.1} parent=1 // pred_fallthru
      _
    // Predicated region
    $region26: #{obs_encoder_fused.1} parent=1 // pred_check
      _
    $region27: #{obs_encoder_fused.1} parent=1 // pred_check_branch
      %60 = sbr.rel (0) target = $region29
    $region28: #{obs_encoder_fused.1} parent=1 // pred_region
      _
    $region29: #{obs_encoder_fused.1} parent=1 // pred_fallthru
      _
    // Predicated region
    $region30: #{obs_encoder_fused.1} parent=1 // pred_check
      _
    $region31: #{obs_encoder_fused.1} parent=1 // pred_check_branch
      %62 = sbr.rel (0) target = $region33
    $region32: #{obs_encoder_fused.1} parent=1 // pred_region
      _
    $region33: #{obs_encoder_fused.1} parent=1 // pred_fallthru
      _
    // Predicated region
    $region34: #{obs_encoder_fused.1} parent=1 // pred_check
      _
    $region35: #{obs_encoder_fused.1} parent=1 // pred_check_branch
      %64 = sbr.rel (0) target = $region37
    $region36: #{obs_encoder_fused.1} parent=1 // pred_region
      _
    $region37: #{obs_encoder_fused.1} parent=1 // pred_fallthru
      _
    // Predicated region
    $region38: #{obs_encoder_fused.1} parent=1 // pred_check
      _
    $region39: #{obs_encoder_fused.1} parent=1 // pred_check_branch
      %66 = sbr.rel (0) target = $region41
    $region40: #{obs_encoder_fused.1} parent=1 // pred_region
      _
    $region41: #{obs_encoder_fused.1} parent=1 // pred_fallthru
      _
    // Predicated region
    $region42: #{obs_encoder_fused.1} parent=1 // pred_check
      _
    $region43: #{obs_encoder_fused.1} parent=1 // pred_check_branch
      %68 = sbr.rel (0) target = $region45
    $region44: #{obs_encoder_fused.1} parent=1 // pred_region
      _
    $region45: #{obs_encoder_fused.1} parent=1 // pred_fallthru
      _
    // Predicated region
    $region46: #{obs_encoder_fused.1} parent=1 // pred_check
      _
    $region47: #{obs_encoder_fused.1} parent=1 // pred_check_branch
      %70 = sbr.rel (0) target = $region49
    $region48: #{obs_encoder_fused.1} parent=1 // pred_region
      %71 = dma.done [#allocation3], 128
    $region49: #{obs_encoder_fused.1} parent=1 // pred_fallthru
      _
    // Predicated region
    $region50: #{obs_encoder_fused.1} parent=1 // pred_check
      _
    $region51: #{obs_encoder_fused.1} parent=1 // pred_check_branch
      %73 = sbr.rel (0) target = $region53
    $region52: #{obs_encoder_fused.1} parent=1 // pred_region
      %74 = dma.done [#allocation6], 6144
    $region53: #{obs_encoder_fused.1} parent=1 // pred_fallthru
      _
    // Predicated region
    $region54: #{obs_encoder_fused.1} parent=1 // pred_check
      _
    $region55: #{obs_encoder_fused.1} parent=1 // pred_check_branch
      %76 = sbr.rel (0) target = $region57
    $region56: #{obs_encoder_fused.1} parent=1 // pred_region
      %77 = dma.done [#allocation6], 6144
    $region57: #{obs_encoder_fused.1} parent=1 // pred_fallthru
      _
    %v78 = vld [vmem:[#allocation2] sm:$0xff]
    %v79 = vld [vmem:[%s1] sm:$0xff]
    %v80 = vld [vmem:[%s1 + $0x8] sm:$0xff]
    %v81 = vld [vmem:[%s1 + $0x10] sm:$0xff]
    %v82 = vld [vmem:[%s1 + $0x18] sm:$0xff]
    %v83 = vld [vmem:[%s1 + $0x20] sm:$0xff]
    %v84 = vld [vmem:[%s1 + $0x28] sm:$0xff]
    %v85 = vld [vmem:[%s1 + $0x30] sm:$0xff]
    %v86 = vld [vmem:[%s1 + $0x38] sm:$0xff]
    %v87 = vld [vmem:[%s1 + $0x40] sm:$0xff]
    %v88 = vld [vmem:[%s1 + $0x48] sm:$0xff]
    %v89 = vld [vmem:[%s1 + $0x50] sm:$0x3]
    %v90 = vld [vmem:[%s1 + $0x58] sm:$0x3]
    %v91 = vld [vmem:[%s2] sm:$0x3]
    %v93 = vlaneseq
    %v94 = vshrl.u32 %v93, 7
    %v95 = vsub.s32 0, %v94
    %v96 = vrot.slane %v91, %v95
    %v97 = vlaneseq
    %v98 = vshrl.u32 %v97, 7
    %v99 = vsub.s32 1, %v98
    %v100 = vrot.slane %v91, %v99
    %vm103 = vcmask 343040
    %v105 = vsel %vm103, %v78, 0
    %vm107 = vcmask 1041408
    %v109 = vsel %vm107, %v89, 0
    %v112 = vsel %vm107, %v90, 0
    %114 = vmatprep.subr.mxu0 0.0
    %115 = vmatpush1.msra.mxu0 0.0
    %116 = vmatprep.subr.mxu0 0.0
    %117 = vmatpush1.msra.mxu0 0.0
    %118 = vmatprep.subr.mxu0 0.0
    %119 = vmatpush1.msra.mxu0 0.0
    %120 = vmatprep.subr.mxu0 0.0
    %121 = vmatpush1.msra.mxu0 0.0
    %122 = vmatprep.subr.mxu0 0.0
    %123 = vmatpush1.msra.mxu0 0.0
    %124 = vmatprep.subr.mxu0 0.0
    %125 = vmatpush1.msra.mxu0 0.0
    %126 = vmatprep.subr.mxu0 0.0
    %127 = vmatpush1.msra.mxu0 0.0
    %128 = vmatprep.subr.mxu0 0.0
    %129 = vmatpush1.msra.mxu0 0.0
    %130 = vmatprep.subr.mxu0 0.0
    %131 = vmatpush1.msra.mxu0 0.0
    %132 = vmatprep.subr.mxu0 0.0
    %133 = vmatpush1.msra.mxu0 0.0
    %134 = vmatprep.subr.mxu0 %v112
    %135 = vmatpush1.msra.mxu0 %v109
    %136 = vmatprep.subr.mxu0 %v88
    %137 = vmatpush1.msra.mxu0 %v87
    %138 = vmatprep.subr.mxu0 %v86
    %139 = vmatpush1.msra.mxu0 %v85
    %140 = vmatprep.subr.mxu0 %v84
    %141 = vmatpush1.msra.mxu0 %v83
    %142 = vmatprep.subr.mxu0 %v82
    %143 = vmatpush1.msra.mxu0 %v81
    %144 = vmatprep.subr.mxu0 %v80
    %145 = vmatpush1.msra.mxu0 %v79
    %146 = vmatprep.subr.mxu0 0.0
    %147 = vmatpush2.msra.mxu0 0.0
    %148 = vmatprep.subr.mxu0 0.0
    %149 = vmatpush2.msra.mxu0 0.0
    %150 = vmatprep.subr.mxu0 0.0
    %151 = vmatpush2.msra.mxu0 0.0
    %152 = vmatprep.subr.mxu0 0.0
    %153 = vmatpush2.msra.mxu0 0.0
    %154 = vmatprep.subr.mxu0 0.0
    %155 = vmatpush2.msra.mxu0 0.0
    %156 = vmatprep.subr.mxu0 0.0
    %157 = vmatpush2.msra.mxu0 0.0
    %158 = vmatprep.subr.mxu0 0.0
    %159 = vmatpush2.msra.mxu0 0.0
    %160 = vmatprep.subr.mxu0 0.0
    %161 = vmatpush2.msra.mxu0 0.0
    %162 = vmatprep.subr.mxu0 0.0
    %163 = vmatpush2.msra.mxu0 0.0
    %164 = vmatprep.subr.mxu0 0.0
    %165 = vmatpush2.msra.mxu0 0.0
    %166 = vmatprep.subr.mxu0 0.0
    %167 = vmatpush2.msra.mxu0 0.0
    %168 = vmatprep.subr.mxu0 0.0
    %169 = vmatpush2.msra.mxu0 0.0
    %170 = vmatprep.subr.mxu0 0.0
    %171 = vmatpush2.msra.mxu0 0.0
    %172 = vmatprep.subr.mxu0 0.0
    %173 = vmatpush2.msra.mxu0 0.0
    %174 = vmatprep.subr.mxu0 0.0
    %175 = vmatpush2.msra.mxu0 0.0
    %176 = vmatprep.subr.mxu0 0.0
    %177 = vmatpush2.msra.mxu0 0.0
    %178 = vmatprep.mubr.f32.mxu0 0.0
    %179 = vmatmul.mubr.f32.gmra.mxu0 %v105
    %v180 = vpop.f32.mrf.mxu0
    %v181 = vadd.f32 %v96, %v180
    %v182 = vpop.f32.mrf.mxu0
    %v183 = vadd.f32 %v100, %v182
    %184 = vdwg.mxu0
    %v185 = vtanh.pop %v181
    %v186 = vtanh.pop %v183
    %v187 = vld [vmem:[%s3] sm:$0xff]
    %v188 = vld [vmem:[%s3 + $0x8] sm:$0xff]
    %v189 = vld [vmem:[%s3 + $0x10] sm:$0xff]
    %v190 = vld [vmem:[%s3 + $0x18] sm:$0xff]
    %v191 = vld [vmem:[%s3 + $0x20] sm:$0xff]
    %v192 = vld [vmem:[%s3 + $0x28] sm:$0xff]
    %v193 = vld [vmem:[%s3 + $0x30] sm:$0xff]
    %v194 = vld [vmem:[%s3 + $0x38] sm:$0xff]
    %v195 = vld [vmem:[%s3 + $0x40] sm:$0xff]
    %v196 = vld [vmem:[%s3 + $0x48] sm:$0xff]
    %v197 = vld [vmem:[%s3 + $0x50] sm:$0xff]
    %v198 = vld [vmem:[%s3 + $0x58] sm:$0xff]
    %v199 = vld [vmem:[%s3 + $0x60] sm:$0xff]
    %v200 = vld [vmem:[%s3 + $0x68] sm:$0xff]
    %v201 = vld [vmem:[%s3 + $0x70] sm:$0xff]
    %v202 = vld [vmem:[%s3 + $0x78] sm:$0xff]
    %v203 = vld [vmem:[%s3 + $0x80] sm:$0xff]
    %v204 = vld [vmem:[%s3 + $0x88] sm:$0xff]
    %v205 = vld [vmem:[%s3 + $0x90] sm:$0xff]
    %v206 = vld [vmem:[%s3 + $0x98] sm:$0xff]
    %v207 = vld [vmem:[%s3 + $0xa0] sm:$0xff]
    %v208 = vld [vmem:[%s3 + $0xa8] sm:$0xff]
    %v209 = vld [vmem:[%s3 + $0xb0] sm:$0xff]
    %v210 = vld [vmem:[%s3 + $0xb8] sm:$0xff]
    %v211 = vld [vmem:[%s3 + $0xc0] sm:$0xff]
    %v212 = vld [vmem:[%s3 + $0xc8] sm:$0xff]
    %v213 = vld [vmem:[%s3 + $0xd0] sm:$0xff]
    %v214 = vld [vmem:[%s3 + $0xd8] sm:$0xff]
    %v215 = vld [vmem:[%s3 + $0xe0] sm:$0xff]
    %v216 = vld [vmem:[%s3 + $0xe8] sm:$0xff]
    %v217 = vld [vmem:[%s3 + $0xf0] sm:$0xff]
    %v218 = vld [vmem:[%s3 + $0xf8] sm:$0xff]
    %v219 = vld [vmem:[%s3 + $0x100] sm:$0xff]
    %v220 = vld [vmem:[%s3 + $0x108] sm:$0xff]
    %v221 = vld [vmem:[%s3 + $0x110] sm:$0xff]
    %v222 = vld [vmem:[%s3 + $0x118] sm:$0xff]
    %v223 = vld [vmem:[%s3 + $0x120] sm:$0xff]
    %v224 = vld [vmem:[%s3 + $0x128] sm:$0xff]
    %v225 = vld [vmem:[%s3 + $0x130] sm:$0xff]
    %v226 = vld [vmem:[%s3 + $0x138] sm:$0xff]
    %v227 = vld [vmem:[%s3 + $0x140] sm:$0xff]
    %v228 = vld [vmem:[%s3 + $0x148] sm:$0xff]
    %v229 = vld [vmem:[%s3 + $0x150] sm:$0xff]
    %v230 = vld [vmem:[%s3 + $0x158] sm:$0xff]
    %v231 = vld [vmem:[%s3 + $0x160] sm:$0xff]
    %v232 = vld [vmem:[%s3 + $0x168] sm:$0xff]
    %v233 = vld [vmem:[%s3 + $0x170] sm:$0xff]
    %v234 = vld [vmem:[%s3 + $0x178] sm:$0xff]
    %vm235 = vcmask 523264
    %v237 = vsel %vm235, %v186, 0
    %239 = vmatprep.subr.mxu0 %v218
    %240 = vmatpush1.msra.mxu0 %v217
    %241 = vmatprep.subr.mxu0 %v216
    %242 = vmatpush1.msra.mxu0 %v215
    %243 = vmatprep.subr.mxu0 %v214
    %244 = vmatpush1.msra.mxu0 %v213
    %245 = vmatprep.subr.mxu0 %v212
    %246 = vmatpush1.msra.mxu0 %v211
    %247 = vmatprep.subr.mxu0 %v210
    %248 = vmatpush1.msra.mxu0 %v209
    %249 = vmatprep.subr.mxu0 %v208
    %250 = vmatpush1.msra.mxu0 %v207
    %251 = vmatprep.subr.mxu0 %v206
    %252 = vmatpush1.msra.mxu0 %v205
    %253 = vmatprep.subr.mxu0 %v204
    %254 = vmatpush1.msra.mxu0 %v203
    %255 = vmatprep.subr.mxu0 %v202
    %256 = vmatpush1.msra.mxu0 %v201
    %257 = vmatprep.subr.mxu0 %v200
    %258 = vmatpush1.msra.mxu0 %v199
    %259 = vmatprep.subr.mxu0 %v198
    %260 = vmatpush1.msra.mxu0 %v197
    %261 = vmatprep.subr.mxu0 %v196
    %262 = vmatpush1.msra.mxu0 %v195
    %263 = vmatprep.subr.mxu0 %v194
    %264 = vmatpush1.msra.mxu0 %v193
    %265 = vmatprep.subr.mxu0 %v192
    %266 = vmatpush1.msra.mxu0 %v191
    %267 = vmatprep.subr.mxu0 %v190
    %268 = vmatpush1.msra.mxu0 %v189
    %269 = vmatprep.subr.mxu0 %v188
    %270 = vmatpush1.msra.mxu0 %v187
    %271 = vmatprep.subr.mxu0 0.0
    %272 = vmatpush2.msra.mxu0 0.0
    %273 = vmatprep.subr.mxu0 0.0
    %274 = vmatpush2.msra.mxu0 0.0
    %275 = vmatprep.subr.mxu0 0.0
    %276 = vmatpush2.msra.mxu0 0.0
    %277 = vmatprep.subr.mxu0 0.0
    %278 = vmatpush2.msra.mxu0 0.0
    %279 = vmatprep.subr.mxu0 0.0
    %280 = vmatpush2.msra.mxu0 0.0
    %281 = vmatprep.subr.mxu0 0.0
    %282 = vmatpush2.msra.mxu0 0.0
    %283 = vmatprep.subr.mxu0 0.0
    %284 = vmatpush2.msra.mxu0 0.0
    %285 = vmatprep.subr.mxu0 0.0
    %286 = vmatpush2.msra.mxu0 0.0
    %287 = vmatprep.subr.mxu0 %v234
    %288 = vmatpush2.msra.mxu0 %v233
    %289 = vmatprep.subr.mxu0 %v232
    %290 = vmatpush2.msra.mxu0 %v231
    %291 = vmatprep.subr.mxu0 %v230
    %292 = vmatpush2.msra.mxu0 %v229
    %293 = vmatprep.subr.mxu0 %v228
    %294 = vmatpush2.msra.mxu0 %v227
    %295 = vmatprep.subr.mxu0 %v226
    %296 = vmatpush2.msra.mxu0 %v225
    %297 = vmatprep.subr.mxu0 %v224
    %298 = vmatpush2.msra.mxu0 %v223
    %299 = vmatprep.subr.mxu0 %v222
    %300 = vmatpush2.msra.mxu0 %v221
    %301 = vmatprep.subr.mxu0 %v220
    %302 = vmatpush2.msra.mxu0 %v219
    %303 = vmatprep.mubr.f32.mxu0 %v237
    %304 = vmatmul.mubr.f32.gmra.mxu0 %v185
    %v305 = vpop.f32.mrf.mxu0
    %v306 = vadd.f32 0.0, %v305
    %v307 = vpop.f32.mrf.mxu0
    %v308 = vadd.f32 0.0, %v307
    %309 = vdwg.mxu0
    %v310 = vmul.f32 %v306, %v185
    %v311 = vmul.f32 %v308, %v186
    %v312 = vld [vmem:[#allocation5] sm:$0xff]
    %v313 = vld [vmem:[#allocation5 + $0x8] sm:$0xff]
    %v314 = vld [vmem:[#allocation5 + $0x10] sm:$0xff]
    %v315 = vld [vmem:[#allocation5 + $0x18] sm:$0xff]
    %v316 = vld [vmem:[#allocation5 + $0x20] sm:$0xff]
    %v317 = vld [vmem:[#allocation5 + $0x28] sm:$0xff]
    %v318 = vld [vmem:[#allocation5 + $0x30] sm:$0xff]
    %v319 = vld [vmem:[#allocation5 + $0x38] sm:$0xff]
    %v320 = vld [vmem:[#allocation5 + $0x40] sm:$0xff]
    %v321 = vld [vmem:[#allocation5 + $0x48] sm:$0xff]
    %v322 = vld [vmem:[#allocation5 + $0x50] sm:$0xff]
    %v323 = vld [vmem:[#allocation5 + $0x58] sm:$0xff]
    %v324 = vld [vmem:[#allocation5 + $0x60] sm:$0xff]
    %v325 = vld [vmem:[#allocation5 + $0x68] sm:$0xff]
    %v326 = vld [vmem:[#allocation5 + $0x70] sm:$0xff]
    %v327 = vld [vmem:[#allocation5 + $0x78] sm:$0xff]
    %v328 = vld [vmem:[#allocation5 + $0x80] sm:$0xff]
    %v329 = vld [vmem:[#allocation5 + $0x88] sm:$0xff]
    %v330 = vld [vmem:[#allocation5 + $0x90] sm:$0xff]
    %v331 = vld [vmem:[#allocation5 + $0x98] sm:$0xff]
    %v332 = vld [vmem:[#allocation5 + $0xa0] sm:$0xff]
    %v333 = vld [vmem:[#allocation5 + $0xa8] sm:$0xff]
    %v334 = vld [vmem:[#allocation5 + $0xb0] sm:$0xff]
    %v335 = vld [vmem:[#allocation5 + $0xb8] sm:$0xff]
    %v336 = vld [vmem:[#allocation5 + $0xc0] sm:$0xff]
    %v337 = vld [vmem:[#allocation5 + $0xc8] sm:$0xff]
    %v338 = vld [vmem:[#allocation5 + $0xd0] sm:$0xff]
    %v339 = vld [vmem:[#allocation5 + $0xd8] sm:$0xff]
    %v340 = vld [vmem:[#allocation5 + $0xe0] sm:$0xff]
    %v341 = vld [vmem:[#allocation5 + $0xe8] sm:$0xff]
    %v342 = vld [vmem:[#allocation5 + $0xf0] sm:$0xff]
    %v343 = vld [vmem:[#allocation5 + $0xf8] sm:$0xff]
    %v344 = vld [vmem:[#allocation5 + $0x100] sm:$0xff]
    %v345 = vld [vmem:[#allocation5 + $0x108] sm:$0xff]
    %v346 = vld [vmem:[#allocation5 + $0x110] sm:$0xff]
    %v347 = vld [vmem:[#allocation5 + $0x118] sm:$0xff]
    %v348 = vld [vmem:[#allocation5 + $0x120] sm:$0xff]
    %v349 = vld [vmem:[#allocation5 + $0x128] sm:$0xff]
    %v350 = vld [vmem:[#allocation5 + $0x130] sm:$0xff]
    %v351 = vld [vmem:[#allocation5 + $0x138] sm:$0xff]
    %v352 = vld [vmem:[#allocation5 + $0x140] sm:$0xff]
    %v353 = vld [vmem:[#allocation5 + $0x148] sm:$0xff]
    %v354 = vld [vmem:[#allocation5 + $0x150] sm:$0xff]
    %v355 = vld [vmem:[#allocation5 + $0x158] sm:$0xff]
    %v356 = vld [vmem:[#allocation5 + $0x160] sm:$0xff]
    %v357 = vld [vmem:[#allocation5 + $0x168] sm:$0xff]
    %v358 = vld [vmem:[#allocation5 + $0x170] sm:$0xff]
    %v359 = vld [vmem:[#allocation5 + $0x178] sm:$0xff]
    %v361 = vsel %vm235, %v311, 0
    %363 = vmatprep.subr.mxu0 %v343
    %364 = vmatpush1.msra.mxu0 %v342
    %365 = vmatprep.subr.mxu0 %v341
    %366 = vmatpush1.msra.mxu0 %v340
    %367 = vmatprep.subr.mxu0 %v339
    %368 = vmatpush1.msra.mxu0 %v338
    %369 = vmatprep.subr.mxu0 %v337
    %370 = vmatpush1.msra.mxu0 %v336
    %371 = vmatprep.subr.mxu0 %v335
    %372 = vmatpush1.msra.mxu0 %v334
    %373 = vmatprep.subr.mxu0 %v333
    %374 = vmatpush1.msra.mxu0 %v332
    %375 = vmatprep.subr.mxu0 %v331
    %376 = vmatpush1.msra.mxu0 %v330
    %377 = vmatprep.subr.mxu0 %v329
    %378 = vmatpush1.msra.mxu0 %v328
    %379 = vmatprep.subr.mxu0 %v327
    %380 = vmatpush1.msra.mxu0 %v326
    %381 = vmatprep.subr.mxu0 %v325
    %382 = vmatpush1.msra.mxu0 %v324
    %383 = vmatprep.subr.mxu0 %v323
    %384 = vmatpush1.msra.mxu0 %v322
    %385 = vmatprep.subr.mxu0 %v321
    %386 = vmatpush1.msra.mxu0 %v320
    %387 = vmatprep.subr.mxu0 %v319
    %388 = vmatpush1.msra.mxu0 %v318
    %389 = vmatprep.subr.mxu0 %v317
    %390 = vmatpush1.msra.mxu0 %v316
    %391 = vmatprep.subr.mxu0 %v315
    %392 = vmatpush1.msra.mxu0 %v314
    %393 = vmatprep.subr.mxu0 %v313
    %394 = vmatpush1.msra.mxu0 %v312
    %395 = vmatprep.subr.mxu0 0.0
    %396 = vmatpush2.msra.mxu0 0.0
    %397 = vmatprep.subr.mxu0 0.0
    %398 = vmatpush2.msra.mxu0 0.0
    %399 = vmatprep.subr.mxu0 0.0
    %400 = vmatpush2.msra.mxu0 0.0
    %401 = vmatprep.subr.mxu0 0.0
    %402 = vmatpush2.msra.mxu0 0.0
    %403 = vmatprep.subr.mxu0 0.0
    %404 = vmatpush2.msra.mxu0 0.0
    %405 = vmatprep.subr.mxu0 0.0
    %406 = vmatpush2.msra.mxu0 0.0
    %407 = vmatprep.subr.mxu0 0.0
    %408 = vmatpush2.msra.mxu0 0.0
    %409 = vmatprep.subr.mxu0 0.0
    %410 = vmatpush2.msra.mxu0 0.0
    %411 = vmatprep.subr.mxu0 %v359
    %412 = vmatpush2.msra.mxu0 %v358
    %413 = vmatprep.subr.mxu0 %v357
    %414 = vmatpush2.msra.mxu0 %v356
    %415 = vmatprep.subr.mxu0 %v355
    %416 = vmatpush2.msra.mxu0 %v354
    %417 = vmatprep.subr.mxu0 %v353
    %418 = vmatpush2.msra.mxu0 %v352
    %419 = vmatprep.subr.mxu0 %v351
    %420 = vmatpush2.msra.mxu0 %v350
    %421 = vmatprep.subr.mxu0 %v349
    %422 = vmatpush2.msra.mxu0 %v348
    %423 = vmatprep.subr.mxu0 %v347
    %424 = vmatpush2.msra.mxu0 %v346
    %425 = vmatprep.subr.mxu0 %v345
    %426 = vmatpush2.msra.mxu0 %v344
    %427 = vmatprep.mubr.f32.mxu0 %v361
    %428 = vmatmul.mubr.f32.gmra.mxu0 %v310
    %v429 = vpop.f32.mrf.mxu0
    %v430 = vadd.f32 0.0, %v429
    %v431 = vpop.f32.mrf.mxu0
    %v432 = vadd.f32 0.0, %v431
    %433 = vdwg.mxu0
    %v434 = vmul.f32 %v430, 1.442695
    %v435 = vpow.pop %v434
    %v436 = vmul.f32 %v432, 1.442695
    %v437 = vpow.pop %v436
    %v438 = vld [vmem:[#allocation7] sm:$0xff]
    %v439 = vld [vmem:[#allocation7 + $0x8] sm:$0xff]
    %v440 = vld [vmem:[#allocation7 + $0x10] sm:$0xff]
    %v441 = vld [vmem:[#allocation7 + $0x18] sm:$0xff]
    %v442 = vld [vmem:[#allocation7 + $0x20] sm:$0xff]
    %v443 = vld [vmem:[#allocation7 + $0x28] sm:$0xff]
    %v444 = vld [vmem:[#allocation7 + $0x30] sm:$0xff]
    %v445 = vld [vmem:[#allocation7 + $0x38] sm:$0xff]
    %v446 = vld [vmem:[#allocation7 + $0x40] sm:$0xff]
    %v447 = vld [vmem:[#allocation7 + $0x48] sm:$0xff]
    %v448 = vld [vmem:[#allocation7 + $0x50] sm:$0xff]
    %v449 = vld [vmem:[#allocation7 + $0x58] sm:$0xff]
    %v450 = vld [vmem:[#allocation7 + $0x60] sm:$0xff]
    %v451 = vld [vmem:[#allocation7 + $0x68] sm:$0xff]
    %v452 = vld [vmem:[#allocation7 + $0x70] sm:$0xff]
    %v453 = vld [vmem:[#allocation7 + $0x78] sm:$0xff]
    %v454 = vld [vmem:[#allocation7 + $0x80] sm:$0xff]
    %v455 = vld [vmem:[#allocation7 + $0x88] sm:$0xff]
    %v456 = vld [vmem:[#allocation7 + $0x90] sm:$0xff]
    %v457 = vld [vmem:[#allocation7 + $0x98] sm:$0xff]
    %v458 = vld [vmem:[#allocation7 + $0xa0] sm:$0xff]
    %v459 = vld [vmem:[#allocation7 + $0xa8] sm:$0xff]
    %v460 = vld [vmem:[#allocation7 + $0xb0] sm:$0xff]
    %v461 = vld [vmem:[#allocation7 + $0xb8] sm:$0xff]
    %v462 = vld [vmem:[#allocation7 + $0xc0] sm:$0xff]
    %v463 = vld [vmem:[#allocation7 + $0xc8] sm:$0xff]
    %v464 = vld [vmem:[#allocation7 + $0xd0] sm:$0xff]
    %v465 = vld [vmem:[#allocation7 + $0xd8] sm:$0xff]
    %v466 = vld [vmem:[#allocation7 + $0xe0] sm:$0xff]
    %v467 = vld [vmem:[#allocation7 + $0xe8] sm:$0xff]
    %v468 = vld [vmem:[#allocation7 + $0xf0] sm:$0xff]
    %v469 = vld [vmem:[#allocation7 + $0xf8] sm:$0xff]
    %v470 = vld [vmem:[#allocation7 + $0x100] sm:$0xff]
    %v471 = vld [vmem:[#allocation7 + $0x108] sm:$0xff]
    %v472 = vld [vmem:[#allocation7 + $0x110] sm:$0xff]
    %v473 = vld [vmem:[#allocation7 + $0x118] sm:$0xff]
    %v474 = vld [vmem:[#allocation7 + $0x120] sm:$0xff]
    %v475 = vld [vmem:[#allocation7 + $0x128] sm:$0xff]
    %v476 = vld [vmem:[#allocation7 + $0x130] sm:$0xff]
    %v477 = vld [vmem:[#allocation7 + $0x138] sm:$0xff]
    %v478 = vld [vmem:[#allocation7 + $0x140] sm:$0xff]
    %v479 = vld [vmem:[#allocation7 + $0x148] sm:$0xff]
    %v480 = vld [vmem:[#allocation7 + $0x150] sm:$0xff]
    %v481 = vld [vmem:[#allocation7 + $0x158] sm:$0xff]
    %v482 = vld [vmem:[#allocation7 + $0x160] sm:$0xff]
    %v483 = vld [vmem:[#allocation7 + $0x168] sm:$0xff]
    %v484 = vld [vmem:[#allocation7 + $0x170] sm:$0xff]
    %v485 = vld [vmem:[#allocation7 + $0x178] sm:$0xff]
    %v487 = vsel %vm235, %v437, 0
    %489 = vmatprep.subr.mxu0 %v469
    %490 = vmatpush1.msra.mxu0 %v468
    %491 = vmatprep.subr.mxu0 %v467
    %492 = vmatpush1.msra.mxu0 %v466
    %493 = vmatprep.subr.mxu0 %v465
    %494 = vmatpush1.msra.mxu0 %v464
    %495 = vmatprep.subr.mxu0 %v463
    %496 = vmatpush1.msra.mxu0 %v462
    %497 = vmatprep.subr.mxu0 %v461
    %498 = vmatpush1.msra.mxu0 %v460
    %499 = vmatprep.subr.mxu0 %v459
    %500 = vmatpush1.msra.mxu0 %v458
    %501 = vmatprep.subr.mxu0 %v457
    %502 = vmatpush1.msra.mxu0 %v456
    %503 = vmatprep.subr.mxu0 %v455
    %504 = vmatpush1.msra.mxu0 %v454
    %505 = vmatprep.subr.mxu0 %v453
    %506 = vmatpush1.msra.mxu0 %v452
    %507 = vmatprep.subr.mxu0 %v451
    %508 = vmatpush1.msra.mxu0 %v450
    %509 = vmatprep.subr.mxu0 %v449
    %510 = vmatpush1.msra.mxu0 %v448
    %511 = vmatprep.subr.mxu0 %v447
    %512 = vmatpush1.msra.mxu0 %v446
    %513 = vmatprep.subr.mxu0 %v445
    %514 = vmatpush1.msra.mxu0 %v444
    %515 = vmatprep.subr.mxu0 %v443
    %516 = vmatpush1.msra.mxu0 %v442
    %517 = vmatprep.subr.mxu0 %v441
    %518 = vmatpush1.msra.mxu0 %v440
    %519 = vmatprep.subr.mxu0 %v439
    %520 = vmatpush1.msra.mxu0 %v438
    %521 = vmatprep.subr.mxu0 0.0
    %522 = vmatpush2.msra.mxu0 0.0
    %523 = vmatprep.subr.mxu0 0.0
    %524 = vmatpush2.msra.mxu0 0.0
    %525 = vmatprep.subr.mxu0 0.0
    %526 = vmatpush2.msra.mxu0 0.0
    %527 = vmatprep.subr.mxu0 0.0
    %528 = vmatpush2.msra.mxu0 0.0
    %529 = vmatprep.subr.mxu0 0.0
    %530 = vmatpush2.msra.mxu0 0.0
    %531 = vmatprep.subr.mxu0 0.0
    %532 = vmatpush2.msra.mxu0 0.0
    %533 = vmatprep.subr.mxu0 0.0
    %534 = vmatpush2.msra.mxu0 0.0
    %535 = vmatprep.subr.mxu0 0.0
    %536 = vmatpush2.msra.mxu0 0.0
    %537 = vmatprep.subr.mxu0 %v485
    %538 = vmatpush2.msra.mxu0 %v484
    %539 = vmatprep.subr.mxu0 %v483
    %540 = vmatpush2.msra.mxu0 %v482
    %541 = vmatprep.subr.mxu0 %v481
    %542 = vmatpush2.msra.mxu0 %v480
    %543 = vmatprep.subr.mxu0 %v479
    %544 = vmatpush2.msra.mxu0 %v478
    %545 = vmatprep.subr.mxu0 %v477
    %546 = vmatpush2.msra.mxu0 %v476
    %547 = vmatprep.subr.mxu0 %v475
    %548 = vmatpush2.msra.mxu0 %v474
    %549 = vmatprep.subr.mxu0 %v473
    %550 = vmatpush2.msra.mxu0 %v472
    %551 = vmatprep.subr.mxu0 %v471
    %552 = vmatpush2.msra.mxu0 %v470
    %553 = vmatprep.mubr.f32.mxu0 %v487
    %554 = vmatmul.mubr.f32.gmra.mxu0 %v435
    %v555 = vpop.f32.mrf.mxu0
    %v556 = vadd.f32 0.0, %v555
    %v557 = vpop.f32.mrf.mxu0
    %v558 = vadd.f32 0.0, %v557
    %559 = vdwg.mxu0
    %v560 = vrcp.pop %v556
    %v561 = vrcp.pop %v558
    %v562 = vmul.f32 %v435, %v560
    %v563 = vmul.f32 %v437, %v561
    %v564 = vmul.f32 %v185, %v562
    %v565 = vmul.f32 %v186, %v563
    %v566 = vld [vmem:[%s6] sm:$0xff]
    %v567 = vld [vmem:[%s6 + $0x8] sm:$0xff]
    %v568 = vld [vmem:[%s6 + $0x10] sm:$0xff]
    %v569 = vld [vmem:[%s6 + $0x18] sm:$0xff]
    %v570 = vld [vmem:[%s6 + $0x20] sm:$0xff]
    %v571 = vld [vmem:[%s6 + $0x28] sm:$0xff]
    %v572 = vld [vmem:[%s6 + $0x30] sm:$0xff]
    %v573 = vld [vmem:[%s6 + $0x38] sm:$0xff]
    %v574 = vld [vmem:[%s6 + $0x40] sm:$0xff]
    %v575 = vld [vmem:[%s6 + $0x48] sm:$0xff]
    %v576 = vld [vmem:[%s6 + $0x50] sm:$0xff]
    %v577 = vld [vmem:[%s6 + $0x58] sm:$0xff]
    %v578 = vld [vmem:[%s6 + $0x60] sm:$0xff]
    %v579 = vld [vmem:[%s6 + $0x68] sm:$0xff]
    %v580 = vld [vmem:[%s6 + $0x70] sm:$0xff]
    %v581 = vld [vmem:[%s6 + $0x78] sm:$0xff]
    %v582 = vld [vmem:[%s6 + $0x80] sm:$0xff]
    %v583 = vld [vmem:[%s6 + $0x88] sm:$0xff]
    %v584 = vld [vmem:[%s6 + $0x90] sm:$0xff]
    %v585 = vld [vmem:[%s6 + $0x98] sm:$0xff]
    %v586 = vld [vmem:[%s6 + $0xa0] sm:$0xff]
    %v587 = vld [vmem:[%s6 + $0xa8] sm:$0xff]
    %v588 = vld [vmem:[%s6 + $0xb0] sm:$0xff]
    %v589 = vld [vmem:[%s6 + $0xb8] sm:$0xff]
    %v590 = vld [vmem:[%s7] sm:$0xff]
    %v591 = vld [vmem:[%s7 + $0x8] sm:$0xff]
    %v592 = vld [vmem:[%s7 + $0x10] sm:$0xff]
    %v593 = vld [vmem:[%s7 + $0x18] sm:$0xff]
    %v594 = vld [vmem:[%s7 + $0x20] sm:$0xff]
    %v595 = vld [vmem:[%s7 + $0x28] sm:$0xff]
    %v596 = vld [vmem:[%s7 + $0x30] sm:$0xff]
    %v597 = vld [vmem:[%s7 + $0x38] sm:$0xff]
    %v598 = vld [vmem:[%s7 + $0x40] sm:$0xff]
    %v599 = vld [vmem:[%s7 + $0x48] sm:$0xff]
    %v600 = vld [vmem:[%s7 + $0x50] sm:$0xff]
    %v601 = vld [vmem:[%s7 + $0x58] sm:$0xff]
    %v602 = vld [vmem:[%s7 + $0x60] sm:$0xff]
    %v603 = vld [vmem:[%s7 + $0x68] sm:$0xff]
    %v604 = vld [vmem:[%s7 + $0x70] sm:$0xff]
    %v605 = vld [vmem:[%s7 + $0x78] sm:$0xff]
    %v606 = vld [vmem:[%s7 + $0x80] sm:$0xff]
    %v607 = vld [vmem:[%s7 + $0x88] sm:$0xff]
    %v608 = vld [vmem:[%s7 + $0x90] sm:$0xff]
    %v609 = vld [vmem:[%s7 + $0x98] sm:$0xff]
    %v610 = vld [vmem:[%s7 + $0xa0] sm:$0xff]
    %v611 = vld [vmem:[%s7 + $0xa8] sm:$0xff]
    %v612 = vld [vmem:[%s7 + $0xb0] sm:$0xff]
    %v613 = vld [vmem:[%s7 + $0xb8] sm:$0xff]
    %614 = vmatprep.subr.mxu0 0.0
    %615 = vmatpush1.msra.mxu0 %v605
    %616 = vmatprep.subr.mxu0 0.0
    %617 = vmatpush1.msra.mxu0 %v604
    %618 = vmatprep.subr.mxu0 0.0
    %619 = vmatpush1.msra.mxu0 %v603
    %620 = vmatprep.subr.mxu0 0.0
    %621 = vmatpush1.msra.mxu0 %v602
    %622 = vmatprep.subr.mxu0 0.0
    %623 = vmatpush1.msra.mxu0 %v601
    %624 = vmatprep.subr.mxu0 0.0
    %625 = vmatpush1.msra.mxu0 %v600
    %626 = vmatprep.subr.mxu0 0.0
    %627 = vmatpush1.msra.mxu0 %v599
    %628 = vmatprep.subr.mxu0 0.0
    %629 = vmatpush1.msra.mxu0 %v598
    %630 = vmatprep.subr.mxu0 0.0
    %631 = vmatpush1.msra.mxu0 %v597
    %632 = vmatprep.subr.mxu0 0.0
    %633 = vmatpush1.msra.mxu0 %v596
    %634 = vmatprep.subr.mxu0 0.0
    %635 = vmatpush1.msra.mxu0 %v595
    %636 = vmatprep.subr.mxu0 0.0
    %637 = vmatpush1.msra.mxu0 %v594
    %638 = vmatprep.subr.mxu0 0.0
    %639 = vmatpush1.msra.mxu0 %v593
    %640 = vmatprep.subr.mxu0 0.0
    %641 = vmatpush1.msra.mxu0 %v592
    %642 = vmatprep.subr.mxu0 0.0
    %643 = vmatpush1.msra.mxu0 %v591
    %644 = vmatprep.subr.mxu0 0.0
    %645 = vmatpush1.msra.mxu0 %v590
    %646 = vmatprep.subr.mxu0 0.0
    %647 = vmatpush2.msra.mxu0 0.0
    %648 = vmatprep.subr.mxu0 0.0
    %649 = vmatpush2.msra.mxu0 0.0
    %650 = vmatprep.subr.mxu0 0.0
    %651 = vmatpush2.msra.mxu0 0.0
    %652 = vmatprep.subr.mxu0 0.0
    %653 = vmatpush2.msra.mxu0 0.0
    %654 = vmatprep.subr.mxu0 0.0
    %655 = vmatpush2.msra.mxu0 0.0
    %656 = vmatprep.subr.mxu0 0.0
    %657 = vmatpush2.msra.mxu0 0.0
    %658 = vmatprep.subr.mxu0 0.0
    %659 = vmatpush2.msra.mxu0 0.0
    %660 = vmatprep.subr.mxu0 0.0
    %661 = vmatpush2.msra.mxu0 0.0
    %662 = vmatprep.subr.mxu0 0.0
    %663 = vmatpush2.msra.mxu0 %v613
    %664 = vmatprep.subr.mxu0 0.0
    %665 = vmatpush2.msra.mxu0 %v612
    %666 = vmatprep.subr.mxu0 0.0
    %667 = vmatpush2.msra.mxu0 %v611
    %668 = vmatprep.subr.mxu0 0.0
    %669 = vmatpush2.msra.mxu0 %v610
    %670 = vmatprep.subr.mxu0 0.0
    %671 = vmatpush2.msra.mxu0 %v609
    %672 = vmatprep.subr.mxu0 0.0
    %673 = vmatpush2.msra.mxu0 %v608
    %674 = vmatprep.subr.mxu0 0.0
    %675 = vmatpush2.msra.mxu0 %v607
    %676 = vmatprep.subr.mxu0 0.0
    %677 = vmatpush2.msra.mxu0 %v606
    %678 = vmatprep.mubr.f32.mxu0 %v237
    %679 = vmatmul.mubr.f32.gmra.mxu0 %v185
    %v680 = vpop.f32.mrf.mxu0
    %v681 = vadd.f32 0.0, %v680
    %v682 = vpop.f32.mrf.mxu0
    %683 = vdwg.mxu0
    %v685 = vsel %vm235, %v565, 0
    %687 = vmatprep.subr.mxu0 0.0
    %688 = vmatpush1.msra.mxu0 %v581
    %689 = vmatprep.subr.mxu0 0.0
    %690 = vmatpush1.msra.mxu0 %v580
    %691 = vmatprep.subr.mxu0 0.0
    %692 = vmatpush1.msra.mxu0 %v579
    %693 = vmatprep.subr.mxu0 0.0
    %694 = vmatpush1.msra.mxu0 %v578
    %695 = vmatprep.subr.mxu0 0.0
    %696 = vmatpush1.msra.mxu0 %v577
    %697 = vmatprep.subr.mxu0 0.0
    %698 = vmatpush1.msra.mxu0 %v576
    %699 = vmatprep.subr.mxu0 0.0
    %700 = vmatpush1.msra.mxu0 %v575
    %701 = vmatprep.subr.mxu0 0.0
    %702 = vmatpush1.msra.mxu0 %v574
    %703 = vmatprep.subr.mxu0 0.0
    %704 = vmatpush1.msra.mxu0 %v573
    %705 = vmatprep.subr.mxu0 0.0
    %706 = vmatpush1.msra.mxu0 %v572
    %707 = vmatprep.subr.mxu0 0.0
    %708 = vmatpush1.msra.mxu0 %v571
    %709 = vmatprep.subr.mxu0 0.0
    %710 = vmatpush1.msra.mxu0 %v570
    %711 = vmatprep.subr.mxu0 0.0
    %712 = vmatpush1.msra.mxu0 %v569
    %713 = vmatprep.subr.mxu0 0.0
    %714 = vmatpush1.msra.mxu0 %v568
    %715 = vmatprep.subr.mxu0 0.0
    %716 = vmatpush1.msra.mxu0 %v567
    %717 = vmatprep.subr.mxu0 0.0
    %718 = vmatpush1.msra.mxu0 %v566
    %719 = vmatprep.subr.mxu0 0.0
    %720 = vmatpush2.msra.mxu0 0.0
    %721 = vmatprep.subr.mxu0 0.0
    %722 = vmatpush2.msra.mxu0 0.0
    %723 = vmatprep.subr.mxu0 0.0
    %724 = vmatpush2.msra.mxu0 0.0
    %725 = vmatprep.subr.mxu0 0.0
    %726 = vmatpush2.msra.mxu0 0.0
    %727 = vmatprep.subr.mxu0 0.0
    %728 = vmatpush2.msra.mxu0 0.0
    %729 = vmatprep.subr.mxu0 0.0
    %730 = vmatpush2.msra.mxu0 0.0
    %731 = vmatprep.subr.mxu0 0.0
    %732 = vmatpush2.msra.mxu0 0.0
    %733 = vmatprep.subr.mxu0 0.0
    %734 = vmatpush2.msra.mxu0 0.0
    %735 = vmatprep.subr.mxu0 0.0
    %736 = vmatpush2.msra.mxu0 %v589
    %737 = vmatprep.subr.mxu0 0.0
    %738 = vmatpush2.msra.mxu0 %v588
    %739 = vmatprep.subr.mxu0 0.0
    %740 = vmatpush2.msra.mxu0 %v587
    %741 = vmatprep.subr.mxu0 0.0
    %742 = vmatpush2.msra.mxu0 %v586
    %743 = vmatprep.subr.mxu0 0.0
    %744 = vmatpush2.msra.mxu0 %v585
    %745 = vmatprep.subr.mxu0 0.0
    %746 = vmatpush2.msra.mxu0 %v584
    %747 = vmatprep.subr.mxu0 0.0
    %748 = vmatpush2.msra.mxu0 %v583
    %749 = vmatprep.subr.mxu0 0.0
    %750 = vmatpush2.msra.mxu0 %v582
    %751 = vmatprep.mubr.f32.mxu0 %v685
    %752 = vmatmul.mubr.f32.gmra.mxu0 %v564
    %v753 = vpop.f32.mrf.mxu0
    %v754 = vadd.f32 %v681, %v753
    %v755 = vpop.f32.mrf.mxu0
    %756 = vdwg.mxu0
    %v757 = vld [vmem:[%s8] sm:$0x1]
    %v759 = vlaneseq
    %v760 = vshrl.u32 %v759, 7
    %v761 = vsub.s32 0, %v760
    %v762 = vrot.slane %v757, %v761
    %v764 = vadd.f32 %v754, %v762
    %v765 = vtanh.pop %v764
    %v766 = vld [vmem:[%s9] sm:$0xff]
    %v767 = vld [vmem:[%s9 + $0x8] sm:$0xff]
    %v768 = vld [vmem:[%s9 + $0x10] sm:$0xff]
    %v769 = vld [vmem:[%s9 + $0x18] sm:$0xff]
    %v770 = vld [vmem:[%s10] sm:$0x1]
    %v772 = vlaneseq
    %v773 = vshrl.u32 %v772, 7
    %v774 = vsub.s32 0, %v773
    %v775 = vrot.slane %v770, %v774
    %vm777 = vcmask 261120
    %v779 = vsel %vm777, %v765, 0
    %781 = vmatprep.subr.mxu0 0.0
    %782 = vmatpush1.msra.mxu0 0.0
    %783 = vmatprep.subr.mxu0 0.0
    %784 = vmatpush1.msra.mxu0 0.0
    %785 = vmatprep.subr.mxu0 0.0
    %786 = vmatpush1.msra.mxu0 0.0
    %787 = vmatprep.subr.mxu0 0.0
    %788 = vmatpush1.msra.mxu0 0.0
    %789 = vmatprep.subr.mxu0 0.0
    %790 = vmatpush1.msra.mxu0 0.0
    %791 = vmatprep.subr.mxu0 0.0
    %792 = vmatpush1.msra.mxu0 0.0
    %793 = vmatprep.subr.mxu0 0.0
    %794 = vmatpush1.msra.mxu0 0.0
    %795 = vmatprep.subr.mxu0 0.0
    %796 = vmatpush1.msra.mxu0 0.0
    %797 = vmatprep.subr.mxu0 0.0
    %798 = vmatpush1.msra.mxu0 0.0
    %799 = vmatprep.subr.mxu0 0.0
    %800 = vmatpush1.msra.mxu0 0.0
    %801 = vmatprep.subr.mxu0 0.0
    %802 = vmatpush1.msra.mxu0 0.0
    %803 = vmatprep.subr.mxu0 0.0
    %804 = vmatpush1.msra.mxu0 0.0
    %805 = vmatprep.subr.mxu0 0.0
    %806 = vmatpush1.msra.mxu0 %v769
    %807 = vmatprep.subr.mxu0 0.0
    %808 = vmatpush1.msra.mxu0 %v768
    %809 = vmatprep.subr.mxu0 0.0
    %810 = vmatpush1.msra.mxu0 %v767
    %811 = vmatprep.subr.mxu0 0.0
    %812 = vmatpush1.msra.mxu0 %v766
    %813 = vmatprep.subr.mxu0 0.0
    %814 = vmatpush2.msra.mxu0 0.0
    %815 = vmatprep.subr.mxu0 0.0
    %816 = vmatpush2.msra.mxu0 0.0
    %817 = vmatprep.subr.mxu0 0.0
    %818 = vmatpush2.msra.mxu0 0.0
    %819 = vmatprep.subr.mxu0 0.0
    %820 = vmatpush2.msra.mxu0 0.0
    %821 = vmatprep.subr.mxu0 0.0
    %822 = vmatpush2.msra.mxu0 0.0
    %823 = vmatprep.subr.mxu0 0.0
    %824 = vmatpush2.msra.mxu0 0.0
    %825 = vmatprep.subr.mxu0 0.0
    %826 = vmatpush2.msra.mxu0 0.0
    %827 = vmatprep.subr.mxu0 0.0
    %828 = vmatpush2.msra.mxu0 0.0
    %829 = vmatprep.subr.mxu0 0.0
    %830 = vmatpush2.msra.mxu0 0.0
    %831 = vmatprep.subr.mxu0 0.0
    %832 = vmatpush2.msra.mxu0 0.0
    %833 = vmatprep.subr.mxu0 0.0
    %834 = vmatpush2.msra.mxu0 0.0
    %835 = vmatprep.subr.mxu0 0.0
    %836 = vmatpush2.msra.mxu0 0.0
    %837 = vmatprep.subr.mxu0 0.0
    %838 = vmatpush2.msra.mxu0 0.0
    %839 = vmatprep.subr.mxu0 0.0
    %840 = vmatpush2.msra.mxu0 0.0
    %841 = vmatprep.subr.mxu0 0.0
    %842 = vmatpush2.msra.mxu0 0.0
    %843 = vmatprep.subr.mxu0 0.0
    %844 = vmatpush2.msra.mxu0 0.0
    %845 = vmatprep.mubr.f32.mxu0 0.0
    %846 = vmatmul.mubr.f32.gmra.mxu0 %v779
    %v847 = vpop.f32.mrf.mxu0
    %v848 = vadd.f32 %v775, %v847
    %v849 = vpop.f32.mrf.mxu0
    %850 = vdwg.mxu0
    %v851 = vtanh.pop %v848
    %852 = vst.msk [vmem:[#allocation8] sm:$0xff] %vm777, %v851
    // Predicated region
    $region58: #{obs_encoder_fused.1} parent=1 // pred_check
      _
    $region59: #{obs_encoder_fused.1} parent=1 // pred_check_branch
      %854 = sbr.rel (0) target = $region61
    $region60: #{obs_encoder_fused.1} parent=1 // pred_region
      %s856 = ssub.s32 128, 128
      %857 = vsyncadd [#allocation4], %s856
      %s859 = sshll.u32 [#allocation8], 4
      %s860 = int_to_ptr.vmem [resolvable:$true] %s859
      %862 = dma.vmem_to_hbm [thread:$0]  %s860, 128, %s11, [#allocation4]
    $region61: #{obs_encoder_fused.1} parent=1 // pred_fallthru
      _
    // Predicated region
    $region62: #{obs_encoder_fused.1} parent=1 // pred_check
      _
    $region63: #{obs_encoder_fused.1} parent=1 // pred_check_branch
      %864 = sbr.rel (0) target = $region65
    $region64: #{obs_encoder_fused.1} parent=1 // pred_region
      %865 = dma.done [#allocation4], 128
    $region65: #{obs_encoder_fused.1} parent=1 // pred_fallthru
      _
    %866 = vsyncpa [#allocation3], 1
    %867 = vsyncpa [#allocation6], 1
    %868 = vsyncpa [#allocation4], 1

</llo_original>
